<compile_context>
chip_gen: v7x
topology: tpu7x:2x2x1
jax: 0.10.0
libtpu: 0.0.40
codegen_flags: <defaults>
</compile_context>

<pallas_src>
import jax
import jax.numpy as jnp
from jax.experimental import pallas as pl
from jax.experimental.pallas import tpu as pltpu


def _cdiv(a, b):
    return (a + b - 1) // b


def _round_up(a, b):
    return _cdiv(a, b) * b


def _convtr_tile_kernel(x_ref, w_ref, b_ref, o_ref):
    # x_ref: (TQ, R*C_in)      im2col tile of the input (taps folded into cols)
    # w_ref: (R*C_in, S*C_out) polyphase weight matrix (all phases at once)
    # b_ref: (1, S*C_out)      bias replicated per phase (f32)
    # o_ref: (TQ, S*C_out)     all `stride` output phases for TQ output groups
    acc = jnp.dot(x_ref[...], w_ref[...], preferred_element_type=jnp.float32)
    o_ref[...] = (acc + b_ref[...]).astype(o_ref.dtype)


def conv_transpose1d_pallas(x, weight, bias, *, stride=1, padding=0, tile_q=256):
    """ConvTranspose1d forward (groups=1, dilation=1, output_padding=0).

    x:      (N, C_in, L_in)    PyTorch NCL layout
    weight: (C_in, C_out, K)   PyTorch ConvTranspose1d weight layout
    bias:   (C_out,)
    returns (N, C_out, L_out), L_out = (L_in - 1)*stride - 2*padding + K
    """
    n, c_in, l_in = x.shape
    w_c_in, c_out, k = weight.shape
    assert w_c_in == c_in
    s = stride
    l_out = (l_in - 1) * s - 2 * padding + k
    assert l_out > 0

    # Polyphase bookkeeping.  Output index t' = q*s + p' (p' in [0, s)):
    #   out[n, c, q*s + p'] = sum_m sum_cin x[n, cin, q + o - m] * w[cin, c, p + m*s]
    # with p = (p' + padding) % s, o = (p' + padding) // s.  Re-index the taps
    # with s_idx = m - o + o_max so every phase uses the SAME R = r + o_max
    # shifted input columns x[:, :, q + o_max - s_idx] (zero outside [0, L_in)).
    r = _cdiv(k, s)                      # taps per phase (before padding shift)
    o_max = (s - 1 + padding) // s       # max per-phase input shift
    taps = r + o_max                     # R: distinct input offsets
    q_len = _cdiv(l_out, s)              # number of output "groups" q

    # Tile the q axis: multiple of 8 sublanes, capped so 2x(in)+2x(out) tiles
    # comfortably fit scoped VMEM on all generations (raise tile_q together
    # with pltpu.CompilerParams(vmem_limit_bytes=...) for huge channel counts).
    tq = max(8, min(_round_up(tile_q, 8), _round_up(q_len, 8)))
    q_pad = _round_up(q_len, tq)
    n_tiles = q_pad // tq

    # ---- polyphase weight matrix: (R*C_in, S*C_out) ------------------------
    # w_mat[s_idx*C_in + cin, p'*C_out + c] = w[cin, c, p + m*s]  (m = s_idx - o_max + o)
    w_cols = []
    for p_prime in range(s):
        p = (p_prime + padding) % s
        o = (p_prime + padding) // s
        col_taps = []
        for s_idx in range(taps):
            m = s_idx - o_max + o
            kk = p + m * s
            if 0 <= m and kk < k:
                col_taps.append(weight[:, :, kk])                 # (C_in, C_out)
            else:
                col_taps.append(jnp.zeros((c_in, c_out), weight.dtype))
        w_cols.append(jnp.concatenate(col_taps, axis=0))          # (R*C_in, C_out)
    w_mat = jnp.concatenate(w_cols, axis=1).astype(x.dtype)       # (R*C_in, S*C_out)

    bias_row = jnp.tile(bias.astype(jnp.float32), (s,))[None, :]  # (1, S*C_out)

    # ---- input im2col over the R tap offsets (NO zero-upsampling) ----------
    # x_col[n, q, s_idx*C_in + cin] = x[n, cin, q + o_max - s_idx]  (0 outside)
    left = taps - 1 - o_max                                       # = r - 1
    right = max(0, q_pad + o_max - l_in)
    x_padded = jnp.pad(x, ((0, 0), (0, 0), (left, right)))
    cols = [x_padded[:, :, taps - 1 - s_idx: taps - 1 - s_idx + q_pad]
            for s_idx in range(taps)]                             # (N, C_in, Q_pad)
    x_col = jnp.stack(cols, axis=1)                               # (N, R, C_in, Q_pad)
    x_col = x_col.transpose(0, 3, 1, 2).reshape(n, q_pad, taps * c_in)

    out_pc = pl.pallas_call(
        _convtr_tile_kernel,
        out_shape=jax.ShapeDtypeStruct((n, q_pad, s * c_out), x.dtype),
        grid=(n, n_tiles),
        in_specs=[
            pl.BlockSpec((None, tq, taps * c_in), lambda b, i: (b, i, 0)),
            pl.BlockSpec((taps * c_in, s * c_out), lambda b, i: (0, 0)),
            pl.BlockSpec((1, s * c_out), lambda b, i: (0, 0)),
        ],
        out_specs=pl.BlockSpec((None, tq, s * c_out), lambda b, i: (b, i, 0)),
        compiler_params=pltpu.CompilerParams(
            dimension_semantics=("parallel", "parallel")),
    )(x_col, w_mat, bias_row)

    # (N, Q_pad, S*C_out) -> (N, Q_pad*S, C_out): free row-major reshape that
    # interleaves the phases into the time axis; crop to L_out, then NLC->NCL.
    out_nlc = out_pc.reshape(n, q_pad * s, c_out)[:, :l_out, :]
    return jnp.transpose(out_nlc, (0, 2, 1))                      # (N, C_out, L_out)


def weight_norm_weight(v, g):
    # torch.nn.utils.weight_norm with default dim=0 on ConvTranspose1d weight
    # (C_in, C_out, K): per-in-channel norm over dims (1, 2).
    norm = jnp.sqrt(jnp.sum(v * v, axis=(1, 2), keepdims=True))
    return g * v / norm


def norm_conv_transpose1d_forward(x, params, *, stride, padding=0, norm="weight_norm"):
    """Forward pass of NormConvTranspose1d."""
    if norm == "weight_norm":
        weight = weight_norm_weight(params["v"], params["g"])
    else:
        weight = params["v"]
    return conv_transpose1d_pallas(x, weight, params["bias"],
                                   stride=stride, padding=padding)


def _reference_conv_transpose1d(x, w, b, stride, padding):
    # Direct (slow) scatter-add reference mirroring PyTorch ConvTranspose1d.
    n, c_in, l_in = x.shape
    _, c_out, k = w.shape
    l_full = (l_in - 1) * stride + k
    out = jnp.zeros((n, c_out, l_full), jnp.float32)
    for l in range(l_in):
        for kk in range(k):
            out = out.at[:, :, l * stride + kk].add(
                jnp.einsum("nc,cd->nd", x[:, :, l], w[:, :, kk]))
    l_out = l_full - 2 * padding
    return out[:, :, padding:padding + l_out] + b[None, :, None]


if __name__ == "__main__":
    key = jax.random.PRNGKey(0)
    k_v, k_g, k_b, k_x, k_v2, k_b2, k_x2 = jax.random.split(key, 7)

    # --- config 1: NormConvTranspose1d(4, 8, kernel_size=4, stride=2,
    #                                   norm='weight_norm'), padding=0 -------
    c_in, c_out, ksz, stride, padding = 4, 8, 4, 2, 0
    batch, length = 2, 16

    bound = 1.0 / jnp.sqrt(c_out * ksz)
    v = jax.random.uniform(k_v, (c_in, c_out, ksz), jnp.float32, -bound, bound)
    g0 = jnp.sqrt(jnp.sum(v * v, axis=(1, 2), keepdims=True))
    g = g0 * (1.0 + 0.1 * jax.random.uniform(k_g, g0.shape, jnp.float32))
    bias = jax.random.uniform(k_b, (c_out,), jnp.float32, -bound, bound)
    x = jax.random.normal(k_x, (batch, c_in, length), jnp.float32)

    out = norm_conv_transpose1d_forward(
        x, {"v": v, "g": g, "bias": bias},
        stride=stride, padding=padding, norm="weight_norm")
    out = jax.block_until_ready(out)

    w_eff = weight_norm_weight(v, g)
    ref = _reference_conv_transpose1d(x, w_eff, bias, stride, padding)
    l_out = (length - 1) * stride - 2 * padding + ksz
    assert out.shape == (batch, c_out, l_out)
    assert jnp.allclose(out, ref, atol=1e-4, rtol=1e-4), "mismatch vs reference (cfg1)"

    # --- config 2: norm='none', uneven phases + nonzero padding -------------
    c_in2, c_out2, ksz2, stride2, padding2 = 4, 8, 5, 3, 1
    v2 = jax.random.uniform(k_v2, (c_in2, c_out2, ksz2), jnp.float32, -0.3, 0.3)
    bias2 = jax.random.uniform(k_b2, (c_out2,), jnp.float32, -0.3, 0.3)
    x2 = jax.random.normal(k_x2, (batch, c_in2, length), jnp.float32)

    out2 = norm_conv_transpose1d_forward(
        x2, {"v": v2, "bias": bias2},
        stride=stride2, padding=padding2, norm="none")
    out2 = jax.block_until_ready(out2)

    ref2 = _reference_conv_transpose1d(x2, v2, bias2, stride2, padding2)
    l_out2 = (length - 1) * stride2 - 2 * padding2 + ksz2
    assert out2.shape == (batch, c_out2, l_out2)
    assert jnp.allclose(out2, ref2, atol=1e-4, rtol=1e-4), "mismatch vs reference (cfg2)"

    print("KERNEL_OK")
</pallas_src>

<mosaic_0001>
module attributes {stable_mosaic.version = 11 : i64} {
  func.func @_convtr_tile_kernel(%arg0: i32, %arg1: i32, %arg2: memref<1x24x8xf32, #tpu.memory_space<vmem>>, %arg3: memref<8x16xf32, #tpu.memory_space<vmem>>, %arg4: memref<1x16xf32, #tpu.memory_space<vmem>>, %arg5: memref<1x24x16xf32, #tpu.memory_space<vmem>>) attributes {dimension_semantics = [#tpu.dimension_semantics<parallel>, #tpu.dimension_semantics<parallel>], iteration_bounds = array<i64: 2, 1>, scalar_prefetch = 0 : i64, scratch_operands = 0 : i64, tpu.core_type = #tpu.core_type<tc>, window_params = [{transform_indices = @transform_0, window_bounds = array<i64: 1, 24, 8>}, {pipeline_mode = #tpu.pipeline_mode<synchronous>, transform_indices = @transform_1, window_bounds = array<i64: 8, 16>}, {pipeline_mode = #tpu.pipeline_mode<synchronous>, transform_indices = @transform_2, window_bounds = array<i64: 1, 16>}, {transform_indices = @transform_3, window_bounds = array<i64: 1, 24, 16>}]} {
    %c0 = arith.constant 0 : index
    %c0_0 = arith.constant 0 : index
    %c0_1 = arith.constant 0 : index
    %0 = vector.load %arg2[%c0, %c0_0, %c0_1] : memref<1x24x8xf32, #tpu.memory_space<vmem>>, vector<1x24x8xf32>
    %1 = vector.shape_cast %0 : vector<1x24x8xf32> to vector<24x8xf32>
    %c0_2 = arith.constant 0 : index
    %c0_3 = arith.constant 0 : index
    %2 = vector.load %arg3[%c0_2, %c0_3] : memref<8x16xf32, #tpu.memory_space<vmem>>, vector<8x16xf32>
    %cst = arith.constant dense<0.000000e+00> : vector<24x16xf32>
    %3 = tpu.matmul %1, %2, %cst {dimension_numbers = #tpu.dot_dimension_numbers<[1], [0], [0], [1], [0, 0, 1, 1], [], []>} : vector<24x8xf32>, vector<8x16xf32>, vector<24x16xf32> -> vector<24x16xf32>
    %c0_4 = arith.constant 0 : index
    %c0_5 = arith.constant 0 : index
    %4 = vector.load %arg4[%c0_4, %c0_5] : memref<1x16xf32, #tpu.memory_space<vmem>>, vector<1x16xf32>
    %5 = vector.broadcast %4 : vector<1x16xf32> to vector<24x16xf32>
    %6 = arith.addf %3, %5 : vector<24x16xf32>
    %c0_6 = arith.constant 0 : index
    %c0_7 = arith.constant 0 : index
    %c0_8 = arith.constant 0 : index
    %7 = vector.load %arg5[%c0_6, %c0_7, %c0_8] : memref<1x24x16xf32, #tpu.memory_space<vmem>>, vector<1x24x16xf32>
    %8 = vector.shape_cast %7 : vector<1x24x16xf32> to vector<24x16xf32>
    %9 = vector.shape_cast %6 : vector<24x16xf32> to vector<1x24x16xf32>
    tpu.vector_store %arg5[%c0_6, %c0_7, %c0_8], %9 {strides = array<i32>} : memref<1x24x16xf32, #tpu.memory_space<vmem>>, vector<1x24x16xf32>,
    return
  }
  func.func @transform_0(%arg0: i32, %arg1: i32) -> (i32, i32, i32) {
    %c0_i32 = arith.constant 0 : i32
    %c0_i32_0 = arith.constant 0 : i32
    return %arg0, %arg1, %c0_i32 : i32, i32, i32
  }
  func.func @transform_1(%arg0: i32, %arg1: i32) -> (i32, i32) {
    %c0_i32 = arith.constant 0 : i32
    %c0_i32_0 = arith.constant 0 : i32
    %c0_i32_1 = arith.constant 0 : i32
    return %c0_i32, %c0_i32_0 : i32, i32
  }
  func.func @transform_2(%arg0: i32, %arg1: i32) -> (i32, i32) {
    %c0_i32 = arith.constant 0 : i32
    %c0_i32_0 = arith.constant 0 : i32
    %c0_i32_1 = arith.constant 0 : i32
    return %c0_i32, %c0_i32_0 : i32, i32
  }
  func.func @transform_3(%arg0: i32, %arg1: i32) -> (i32, i32, i32) {
    %c0_i32 = arith.constant 0 : i32
    %c0_i32_0 = arith.constant 0 : i32
    return %arg0, %arg1, %c0_i32 : i32, i32, i32
  }
}

</mosaic_0001>

<llo_original>
// kernel: tpu_custom_call.1
$region0: #{tpu_custom_call.1}
  #allocation0 [shape = 'u32[]', space=smem, size = 0x4, offset = 0x4, fixed_abs, tag = 'smem constant byte address 0x4 - core index']
  #allocation1 [shape = 'u32[144,128]{1,0:T(1,128)}', space=vmem, size = 0x12000, scoped, tag = 'internal scratch']
  %s0 = inlined_call_operand.vmem [shape: f32[2,24,8], index: 0, kind: input, shape index: {}]
  %s1 = inlined_call_operand.vmem [shape: f32[8,16], index: 1, kind: input, shape index: {}]
  %s2 = inlined_call_operand.vmem [shape: f32[1,16], index: 2, kind: input, shape index: {}]
  %s3 = inlined_call_operand.vmem [shape: f32[2,24,16], index: 3, kind: output, shape index: {}]
  %s4 = sld [smem:[#allocation0]]
  $region45: #{tpu_custom_call.1} parent=0
    _
  %s6 = ssub.s32 1, %s4
  %s7 = scalar_select 0, %s6, %s4
  loop: start=0, step=1, limit=4
  $region2: #{tpu_custom_call.1} parent=0 // loop_pre_header
    _
  $region3: #{tpu_custom_call.1} parent=0 // loop_header
    %s9 = sphi 0, %s13
    %p10 = scmp.ge.s32.totalorder %s9, 4
    %s16 = sphi 0, %s28
    %s17 = sphi 0, %s24
    %s18 = sphi 0, %s16
    %s19 = sphi 0, %s17
    %s20 = sphi 0, %s18
    %s21 = sphi 0, %s19
    %s33 = sphi 0, %s35
    %s36 = sphi 0, %s33
    %s37 = sphi 0, %s36
    %s53 = sphi 0, %s37
    %s57 = sphi 0, %s57
    %s59 = sphi 0, %s57
    %s60 = sphi 0, %s59
    %s74 = sphi 0, %s60
    %s78 = sphi 0, %s78
    %s80 = sphi 0, %s78
    %s81 = sphi 0, %s80
    %s95 = sphi 0, %s81
    %s103 = sphi 0, %s105
    %s106 = sphi 0, %s103
    %s107 = sphi 0, %s106
    %s123 = sphi 0, %s107
  $region4: #{tpu_custom_call.1} parent=0 // loop_header_branch
    %12 = sbr.rel (%p10) target = $region8
  $region5: #{tpu_custom_call.1} parent=0 // loop_body
    %s14 = ssub.s32 %s9, 1
    %s15 = ssub.s32 %s9, 2
    %s22 = sadd.s32 1, %s17
    %p23 = scmp.ge.s32.totalorder %s22, 1
    %s24 = scalar_select %p23, 0, %s22
    %s25 = sadd.s32 1, %s16
    %s26 = scalar_select %p23, %s25, %s16
    %p27 = scmp.ge.s32.totalorder %s26, 2
    %s28 = scalar_select %p27, 0, %s26
    %s29 = ssub.s32 %s16, %s28
    %s30 = ssub.s32 %s17, %s24
    %s31 = sor.u32 %s29, %s30
    %p32 = scmp.eq.s32.totalorder %s31, 0
    %s34 = sadd.s32 %s33, 1
    %s35 = scalar_select %p32, %s33, %s34
    %p38 = pneg %p32
    %p39 = scmp.eq.s32.totalorder %s9, 1
    %p40 = por %p38, %p39
    %p41 = scmp.ne.s32.totalorder %s33, %s36
    %p42 = scmp.eq.s32.totalorder %s9, 0
    %p43 = por %p41, %p42
    %p44 = scmp.ne.s32.totalorder %s33, %s36
    %p45 = scmp.eq.s32.totalorder %s14, 1
    %p46 = por %p44, %p45
    %p47 = scmp.ne.s32.totalorder %s36, %s37
    %p48 = scmp.eq.s32.totalorder %s14, 0
    %p49 = por %p47, %p48
    %p50 = scmp.ne.s32.totalorder %s36, %s37
    %p51 = scmp.eq.s32.totalorder %s15, 1
    %p52 = por %p50, %p51
    %p54 = scmp.ne.s32.totalorder %s37, %s53
    %p55 = scmp.eq.s32.totalorder %s15, 0
    %p56 = por %p54, %p55
    %s58 = sadd.s32 %s57, 1
    %p61 = scmp.eq.s32.totalorder %s9, 1
    %p62 = scmp.ne.s32.totalorder %s57, %s59
    %p63 = scmp.eq.s32.totalorder %s9, 0
    %p64 = por %p62, %p63
    %p65 = scmp.ne.s32.totalorder %s57, %s59
    %p66 = scmp.eq.s32.totalorder %s14, 1
    %p67 = por %p65, %p66
    %p68 = scmp.ne.s32.totalorder %s59, %s60
    %p69 = scmp.eq.s32.totalorder %s14, 0
    %p70 = por %p68, %p69
    %p71 = scmp.ne.s32.totalorder %s59, %s60
    %p72 = scmp.eq.s32.totalorder %s15, 1
    %p73 = por %p71, %p72
    %p75 = scmp.ne.s32.totalorder %s60, %s74
    %p76 = scmp.eq.s32.totalorder %s15, 0
    %p77 = por %p75, %p76
    %s79 = sadd.s32 %s78, 1
    %p82 = scmp.eq.s32.totalorder %s9, 1
    %p83 = scmp.ne.s32.totalorder %s78, %s80
    %p84 = scmp.eq.s32.totalorder %s9, 0
    %p85 = por %p83, %p84
    %p86 = scmp.ne.s32.totalorder %s78, %s80
    %p87 = scmp.eq.s32.totalorder %s14, 1
    %p88 = por %p86, %p87
    %p89 = scmp.ne.s32.totalorder %s80, %s81
    %p90 = scmp.eq.s32.totalorder %s14, 0
    %p91 = por %p89, %p90
    %p92 = scmp.ne.s32.totalorder %s80, %s81
    %p93 = scmp.eq.s32.totalorder %s15, 1
    %p94 = por %p92, %p93
    %p96 = scmp.ne.s32.totalorder %s81, %s95
    %p97 = scmp.eq.s32.totalorder %s15, 0
    %p98 = por %p96, %p97
    %s99 = ssub.s32 %s16, %s28
    %s100 = ssub.s32 %s17, %s24
    %s101 = sor.u32 %s99, %s100
    %p102 = scmp.eq.s32.totalorder %s101, 0
    %s104 = sadd.s32 %s103, 1
    %s105 = scalar_select %p102, %s103, %s104
    %p108 = pneg %p102
    %p109 = scmp.eq.s32.totalorder %s9, 1
    %p110 = por %p108, %p109
    %p111 = scmp.ne.s32.totalorder %s103, %s106
    %p112 = scmp.eq.s32.totalorder %s9, 0
    %p113 = por %p111, %p112
    %p114 = scmp.ne.s32.totalorder %s103, %s106
    %p115 = scmp.eq.s32.totalorder %s14, 1
    %p116 = por %p114, %p115
    %p117 = scmp.ne.s32.totalorder %s106, %s107
    %p118 = scmp.eq.s32.totalorder %s14, 0
    %p119 = por %p117, %p118
    %p120 = scmp.ne.s32.totalorder %s106, %s107
    %p121 = scmp.eq.s32.totalorder %s15, 1
    %p122 = por %p120, %p121
    %p124 = scmp.ne.s32.totalorder %s107, %s123
    %p125 = scmp.eq.s32.totalorder %s15, 0
    %p126 = por %p124, %p125
    %p127 = scmp.le.s32.totalorder 1, %s9
    %p128 = scmp.lt.s32.totalorder %s9, 3
    %p129 = pnand %p127, %p128
    %p130 = pneg %p129
    // Predicated region
    $region9: #{tpu_custom_call.1} parent=5 // pred_check
      _
    $region10: #{tpu_custom_call.1} parent=5 // pred_check_branch
      %132 = sbr.rel (%p129) target = $region12
    $region11: #{tpu_custom_call.1} parent=5 // pred_region
      %s133 = ssub.s32 %s9, 1
      // Predicated region
      $region13: #{tpu_custom_call.1} parent=11 // pred_check
        %p134 = pneg %p70
      $region14: #{tpu_custom_call.1} parent=11 // pred_check_branch
        %136 = sbr.rel (%p134) target = $region16
      $region15: #{tpu_custom_call.1} parent=11 // pred_region
        _
      $region16: #{tpu_custom_call.1} parent=11 // pred_fallthru
        _
      // Predicated region
      $region17: #{tpu_custom_call.1} parent=11 // pred_check
        %p137 = pneg %p91
      $region18: #{tpu_custom_call.1} parent=11 // pred_check_branch
        %139 = sbr.rel (%p137) target = $region20
      $region19: #{tpu_custom_call.1} parent=11 // pred_region
        _
      $region20: #{tpu_custom_call.1} parent=11 // pred_fallthru
        _
    $region12: #{tpu_custom_call.1} parent=5 // pred_fallthru
      _
    %p140 = scmp.lt.s32.totalorder %s9, 2
    // Predicated region
    $region21: #{tpu_custom_call.1} parent=5 // pred_check
      %p141 = pneg %p140
    $region22: #{tpu_custom_call.1} parent=5 // pred_check_branch
      %143 = sbr.rel (%p141) target = $region24
    $region23: #{tpu_custom_call.1} parent=5 // pred_region
      // Predicated region
      $region25: #{tpu_custom_call.1} parent=23 // pred_check
        %p144 = pneg %p43
      $region26: #{tpu_custom_call.1} parent=23 // pred_check_branch
        %146 = sbr.rel (%p144) target = $region28
      $region27: #{tpu_custom_call.1} parent=23 // pred_region
        %s147 = smul.u32 3, %s17
        %p148 = scmp.lt.s32.totalorder %s16, 1
        %s149 = scalar_select %p148, %s16, 1
        %p150 = scmp.lt.s32.totalorder %s147, 2
        %s151 = scalar_select %p150, %s147, 2
        %s152 = smul.addr %s149, 3
        %s153 = sadd.s32 %s151, %s152
        %s154 = smul.addr %s153, 8
        %s155 = scalar_lea.vmem %s0, %s154
        %s156 = smul.u32 3, %s17
      $region28: #{tpu_custom_call.1} parent=23 // pred_fallthru
        _
    $region24: #{tpu_custom_call.1} parent=5 // pred_fallthru
      _
    %p157 = scmp.le.s32.totalorder 1, %s9
    %p158 = scmp.lt.s32.totalorder %s9, 3
    %p159 = pnand %p157, %p158
    %p160 = pneg %p159
    // Predicated region
    $region29: #{tpu_custom_call.1} parent=5 // pred_check
      _
    $region30: #{tpu_custom_call.1} parent=5 // pred_check_branch
      %162 = sbr.rel (%p159) target = $region32
    $region31: #{tpu_custom_call.1} parent=5 // pred_region
      %s163 = ssub.s32 %s9, 1
      %s164 = smul.u32 3, %s19
      %p165 = scmp.lt.s32.totalorder %s18, 1
      %s166 = scalar_select %p165, %s18, 1
      %p167 = scmp.lt.s32.totalorder %s164, 2
      %s168 = scalar_select %p167, %s164, 2
      %s169 = smul.addr %s166, 3
      %s170 = sadd.s32 %s168, %s169
      %s171 = smul.addr %s170, 8
      %s172 = scalar_lea.vmem %s0, %s171
      %p173 = pneg %p49
      %p174 = pneg %p46
      %p175 = pneg %p70
      %p176 = pneg %p67
      %p177 = pneg %p91
      %p178 = pneg %p88
      %p179 = pneg %p119
      %p180 = pneg %p116
      %s181 = smul.u32 3, %s19
      %p182 = scmp.lt.s32.totalorder %s18, 1
      %s183 = scalar_select %p182, %s18, 1
      %p184 = scmp.lt.s32.totalorder %s181, 2
      %s185 = scalar_select %p184, %s181, 2
      %s186 = smul.addr %s183, 3
      %s187 = sadd.s32 %s185, %s186
      %s188 = smul.addr %s187, 8
      %s189 = scalar_lea.vmem %s3, %s188
      %s190 = smul.u32 3, %s19
      %p191 = scmp.lt.s32.totalorder %s18, 1
      %s192 = scalar_select %p191, %s18, 1
      %p193 = scmp.lt.s32.totalorder %s190, 2
      %s194 = scalar_select %p193, %s190, 2
      %s195 = smul.addr %s192, 3
      %s196 = sadd.s32 %s194, %s195
      %s197 = smul.addr %s196, 8
      %s198 = scalar_lea.vmem %s0, %s197
      %s199 = smul.u32 3, %s19
      %s200 = smul.u32 3, %s19
      %p201 = scmp.lt.s32.totalorder %s18, 1
      %s202 = scalar_select %p201, %s18, 1
      %p203 = scmp.lt.s32.totalorder %s200, 2
      %s204 = scalar_select %p203, %s200, 2
      %s205 = smul.addr %s202, 3
      %s206 = sadd.s32 %s204, %s205
      %s207 = smul.addr %s206, 8
      %s208 = scalar_lea.vmem %s3, %s207
      %s209 = smul.u32 3, %s19
      %v210 = vld [vmem:[%s198] sm:$0xff]
      %v211 = vld [vmem:[%s198 + $0x8] sm:$0xff]
      %v212 = vld [vmem:[%s198 + $0x10] sm:$0xff]
      %v213 = vld [vmem:[%s1] sm:$0xff]
      %v214 = vld [vmem:[%s2] sm:$0x1]
      %v216 = vlaneseq
      %v217 = vshrl.u32 %v216, 7
      %v218 = vsub.s32 0, %v217
      %v219 = vrot.slane %v214, %v218
      %vm221 = vcmask 64512
      %v223 = vsel %vm221, %v210, 0
      %v226 = vsel %vm221, %v211, 0
      %v229 = vsel %vm221, %v212, 0
      %231 = vmatprep.subr.mxu0 0.0
      %232 = vmatpush1.msra.mxu0 %v213
      %233 = vmatprep.subr.mxu0 0.0
      %234 = vmatpush1.msra.mxu0 0.0
      %235 = vmatprep.subr.mxu0 0.0
      %236 = vmatpush1.msra.mxu0 0.0
      %237 = vmatprep.subr.mxu0 0.0
      %238 = vmatpush1.msra.mxu0 0.0
      %239 = vmatprep.subr.mxu0 0.0
      %240 = vmatpush1.msra.mxu0 0.0
      %241 = vmatprep.subr.mxu0 0.0
      %242 = vmatpush1.msra.mxu0 0.0
      %243 = vmatprep.subr.mxu0 0.0
      %244 = vmatpush1.msra.mxu0 0.0
      %245 = vmatprep.subr.mxu0 0.0
      %246 = vmatpush1.msra.mxu0 0.0
      %247 = vmatprep.subr.mxu0 0.0
      %248 = vmatpush1.msra.mxu0 0.0
      %249 = vmatprep.subr.mxu0 0.0
      %250 = vmatpush1.msra.mxu0 0.0
      %251 = vmatprep.subr.mxu0 0.0
      %252 = vmatpush1.msra.mxu0 0.0
      %253 = vmatprep.subr.mxu0 0.0
      %254 = vmatpush1.msra.mxu0 0.0
      %255 = vmatprep.subr.mxu0 0.0
      %256 = vmatpush1.msra.mxu0 0.0
      %257 = vmatprep.subr.mxu0 0.0
      %258 = vmatpush1.msra.mxu0 0.0
      %259 = vmatprep.subr.mxu0 0.0
      %260 = vmatpush1.msra.mxu0 0.0
      %261 = vmatprep.subr.mxu0 0.0
      %262 = vmatpush1.msra.mxu0 0.0
      %263 = vmatprep.subr.mxu0 0.0
      %264 = vmatpush1.msra.mxu0 0.0
      %265 = vmatprep.subr.mxu0 0.0
      %266 = vmatpush1.msra.mxu0 0.0
      %267 = vmatprep.subr.mxu0 0.0
      %268 = vmatpush1.msra.mxu0 0.0
      %269 = vmatprep.subr.mxu0 0.0
      %270 = vmatpush1.msra.mxu0 0.0
      %271 = vmatprep.subr.mxu0 0.0
      %272 = vmatpush1.msra.mxu0 0.0
      %273 = vmatprep.subr.mxu0 0.0
      %274 = vmatpush1.msra.mxu0 0.0
      %275 = vmatprep.subr.mxu0 0.0
      %276 = vmatpush1.msra.mxu0 0.0
      %277 = vmatprep.subr.mxu0 0.0
      %278 = vmatpush1.msra.mxu0 0.0
      %279 = vmatprep.subr.mxu0 0.0
      %280 = vmatpush1.msra.mxu0 0.0
      %281 = vmatprep.subr.mxu0 0.0
      %282 = vmatpush1.msra.mxu0 0.0
      %283 = vmatprep.subr.mxu0 0.0
      %284 = vmatpush1.msra.mxu0 0.0
      %285 = vmatprep.subr.mxu0 0.0
      %286 = vmatpush1.msra.mxu0 0.0
      %287 = vmatprep.subr.mxu0 0.0
      %288 = vmatpush1.msra.mxu0 0.0
      %289 = vmatprep.subr.mxu0 0.0
      %290 = vmatpush1.msra.mxu0 0.0
      %291 = vmatprep.subr.mxu0 0.0
      %292 = vmatpush1.msra.mxu0 0.0
      %293 = vmatprep.subr.mxu0 0.0
      %294 = vmatpush1.msra.mxu0 0.0
      %295 = vmatprep.mubr.f32.mxu0 0.0
      %296 = vmatmul.mubr.f32.gmra.mrb[0].mxu0 %v223
      %v297 = vpop.f32.mrb[0].mxu0
      %v298 = vadd.f32 %v219, %v297
      %v299 = vpop.f32.mrb[0].mxu0
      %300 = vmatprep.mubr.f32.mxu0 0.0
      %301 = vmatmul.mubr.f32.gmra.mrb[0].mxu0 %v226
      %v302 = vpop.f32.mrb[0].mxu0
      %v303 = vadd.f32 %v219, %v302
      %v304 = vpop.f32.mrb[0].mxu0
      %305 = vmatprep.mubr.f32.mxu0 0.0
      %306 = vmatmul.mubr.f32.gmra.mrb[0].mxu0 %v229
      %v307 = vpop.f32.mrb[0].mxu0
      %v308 = vadd.f32 %v219, %v307
      %v309 = vpop.f32.mrb[0].mxu0
      %310 = vdwg.mxu0
      %vm311 = vcmask 130048
      %312 = vst.msk [vmem:[%s208] sm:$0xff] %vm311, %v298
      %313 = vst.msk [vmem:[%s208 + $0x8] sm:$0xff] %vm311, %v303
      %314 = vst.msk [vmem:[%s208 + $0x10] sm:$0xff] %vm311, %v308
      %s315 = smul.u32 3, %s19
      %p316 = scmp.lt.s32.totalorder %s18, 1
      %s317 = scalar_select %p316, %s18, 1
      %p318 = scmp.lt.s32.totalorder %s315, 2
      %s319 = scalar_select %p318, %s315, 2
      %s320 = smul.addr %s317, 3
      %s321 = sadd.s32 %s319, %s320
      %s322 = smul.addr %s321, 8
      %s323 = scalar_lea.vmem %s3, %s322
      // Predicated region
      $region33: #{tpu_custom_call.1} parent=31 // pred_check
        %p324 = pneg %p116
      $region34: #{tpu_custom_call.1} parent=31 // pred_check_branch
        %326 = sbr.rel (%p324) target = $region36
      $region35: #{tpu_custom_call.1} parent=31 // pred_region
        %s327 = smul.u32 3, %s19
      $region36: #{tpu_custom_call.1} parent=31 // pred_fallthru
        _
    $region32: #{tpu_custom_call.1} parent=5 // pred_fallthru
      _
    %p328 = scmp.le.s32.totalorder 2, %s9
    // Predicated region
    $region37: #{tpu_custom_call.1} parent=5 // pred_check
      %p329 = pneg %p328
    $region38: #{tpu_custom_call.1} parent=5 // pred_check_branch
      %331 = sbr.rel (%p329) target = $region40
    $region39: #{tpu_custom_call.1} parent=5 // pred_region
      %s332 = ssub.s32 %s9, 2
      // Predicated region
      $region41: #{tpu_custom_call.1} parent=39 // pred_check
        %p333 = pneg %p122
      $region42: #{tpu_custom_call.1} parent=39 // pred_check_branch
        %335 = sbr.rel (%p333) target = $region44
      $region43: #{tpu_custom_call.1} parent=39 // pred_region
        %s336 = smul.u32 3, %s21
        %p337 = scmp.lt.s32.totalorder %s20, 1
        %s338 = scalar_select %p337, %s20, 1
        %p339 = scmp.lt.s32.totalorder %s336, 2
        %s340 = scalar_select %p339, %s336, 2
        %s341 = smul.addr %s338, 3
        %s342 = sadd.s32 %s340, %s341
        %s343 = smul.addr %s342, 8
        %s344 = scalar_lea.vmem %s3, %s343
      $region44: #{tpu_custom_call.1} parent=39 // pred_fallthru
        _
    $region40: #{tpu_custom_call.1} parent=5 // pred_fallthru
      _
  $region6: #{tpu_custom_call.1} parent=0 // loop_footer
    %s13 = sadd.s32 1, %s9
  $region7: #{tpu_custom_call.1} parent=0 // loop_footer_branch
    %8 = sbr.rel target = $region3
  $region8: #{tpu_custom_call.1} parent=0 // loop_exit
    _

</llo_original>
